<compile_context>
chip_gen: v6e
topology: v6e:2x2x1
jax: 0.10.0
libtpu: 0.0.40
codegen_flags: <defaults>
</compile_context>

<pallas_src>
import functools

import jax
import jax.numpy as jnp
from jax import lax
from jax.experimental import pallas as pl
from jax.experimental.pallas import tpu as pltpu

H = W = 7                  # fixed by fc = Linear(7*7*2, 1)
S = H * W                  # 49 flattened spatial positions
KS = 3                     # conv kernel size
PAD = KS // 2              # 'same' padding
POFF = W + PAD             # 8 == max |flattened tap offset|


def _spatial_attention_kernel(x_ref, fc_w_ref, fc_b_ref, conv_w_ref,
                              out_ref, sum_ref, max_ref,
                              *, n_tile, c_tile, c_valid, inv_c, mask_c):
    # x_ref:      (n_tile, c_tile, S)  VMEM   (one batch/channel tile)
    # fc_w_ref:   (2, S)               VMEM   (fc weight, [avg_chan; max_chan])
    # fc_b_ref:   (1,)                 SMEM
    # conv_w_ref: (2*KS*KS,)           SMEM   (conv1 weight, [c, kh, kw] order)
    # out_ref:    (n_tile, S)          VMEM   (leading grid dim squeezed)
    # sum_ref/max_ref: (n_tile, S) f32 VMEM scratch (persist across c steps)
    c_step = pl.program_id(1)

    # ---- init per-batch-tile accumulators at the first channel step -------
    @pl.when(c_step == 0)
    def _():
        sum_ref[...] = jnp.zeros_like(sum_ref)
        max_ref[...] = jnp.full_like(max_ref, -jnp.inf)

    # ---- chunked channel reduction over this (n_tile, c_tile, S) block ----
    csub = 8 if c_tile >= 8 else c_tile
    n_full, rem = divmod(c_tile, csub)

    def chunk(base, size, s_acc, m_acc):
        xk = x_ref[:, pl.ds(base, size), :].astype(jnp.float32)
        s_acc = s_acc + jnp.sum(xk, axis=1)          # zero-padded chans add 0
        if mask_c:                                   # static flag
            ch = (c_step * c_tile + base
                  + lax.broadcasted_iota(jnp.int32, (1, size, 1), 1))
            xk = jnp.where(ch < c_valid, xk, -jnp.inf)
        m_acc = jnp.maximum(m_acc, jnp.max(xk, axis=1))
        return s_acc, m_acc

    s_loc = jnp.zeros((n_tile, S), jnp.float32)
    m_loc = jnp.full((n_tile, S), -jnp.inf, jnp.float32)
    if n_full == 1:
        s_loc, m_loc = chunk(0, csub, s_loc, m_loc)
    elif n_full > 1:
        def body(k, carry):
            return chunk(pl.multiple_of(k * csub, csub), csub, *carry)
        s_loc, m_loc = lax.fori_loop(0, n_full, body, (s_loc, m_loc),
                                     unroll=n_full <= 4)
    if rem:
        s_loc, m_loc = chunk(n_full * csub, rem, s_loc, m_loc)

    sum_ref[...] += s_loc
    max_ref[...] = jnp.maximum(max_ref[...], m_loc)

    # ---- finalize once per batch tile (last channel step) -----------------
    @pl.when(c_step == pl.num_programs(1) - 1)
    def _():
        avg = sum_ref[...] * inv_c                   # (n_tile, S)
        mx = max_ref[...]                            # (n_tile, S)

        # fc(x_c.view(n, -1)) -> sigmoid -> p_x : one lane reduce per row.
        w = fc_w_ref[...]                            # (2, S)
        logit = jnp.sum(avg * w[0:1, :] + mx * w[1:2, :],
                        axis=-1, keepdims=True) + fc_b_ref[0]
        p_x = jax.nn.sigmoid(logit)                  # (n_tile, 1)

        # 3x3 'same' conv on the 2-channel (avg, max) rows: 18 static-offset
        # taps on zero-padded flat rows + column-boundary masks.
        zpad = jnp.zeros((n_tile, POFF), jnp.float32)
        xpad = (jnp.concatenate([zpad, avg, zpad], axis=1),
                jnp.concatenate([zpad, mx, zpad], axis=1))  # (n_tile, S+2*POFF)

        col = lax.broadcasted_iota(jnp.int32, (1, S), 1) % W
        left_ok = col >= PAD                 # valid output cols for kw == 0
        right_ok = col <= W - 1 - PAD        # valid output cols for kw == 2

        acc = jnp.zeros((n_tile, S), jnp.float32)
        for c in range(2):
            for kh in range(KS):
                for kw in range(KS):
                    wgt = conv_w_ref[(c * KS + kh) * KS + kw]   # SMEM scalar
                    off = (kh - PAD) * W + (kw - PAD)
                    tap = xpad[c][:, POFF + off:POFF + off + S]
                    if kw == 0:
                        tap = jnp.where(left_ok, tap, 0.0)
                    elif kw == KS - 1:
                        tap = jnp.where(right_ok, tap, 0.0)
                    acc = acc + wgt * tap

        out_ref[...] = (jax.nn.sigmoid(acc) * p_x).astype(out_ref.dtype)


def spatial_attention(x, fc_w, fc_b, conv_w, *, n_tile=None, c_tile=None):
    """x: (N, C, 7, 7); fc_w: (1, 98); fc_b: (1,); conv_w: (1, 2, 3, 3)."""
    N, C, Hx, Wx = x.shape
    if (Hx, Wx) != (H, W):
        raise ValueError("SpatialAttention expects 7x7 spatial maps")

    # ---- tile selection ---------------------------------------------------
    if n_tile is None:
        n_tile = min(N, 128)                  # batch rows per grid step
    n_tile = max(1, min(int(n_tile), N))
    num_n = pl.cdiv(N, n_tile)
    n_pad = num_n * n_tile

    if c_tile is None:
        c_tile = C if C <= 128 else 128       # channels per grid step
    c_tile = max(1, min(int(c_tile), C))
    if c_tile < C:                            # sublane-blocked => multiple of 8
        c_tile = (c_tile // 8) * 8
        if c_tile == 0:
            c_tile = 8
        c_tile = min(c_tile, C)
    num_c = pl.cdiv(C, c_tile)
    c_pad = num_c * c_tile

    # ---- lane-friendly re-layout (free reshape; zero-pad batch/channels) --
    x_r = x.reshape(N, C, S)
    if (n_pad, c_pad) != (N, C):
        x_r = jnp.pad(x_r, ((0, n_pad - N), (0, c_pad - C), (0, 0)))

    fc_w_rows = fc_w.reshape(2, S).astype(jnp.float32)   # matches view(N,-1)
    fc_b_s = fc_b.reshape(1).astype(jnp.float32)
    conv_w_flat = conv_w.reshape(-1).astype(jnp.float32)  # (18,)

    kernel = functools.partial(
        _spatial_attention_kernel,
        n_tile=n_tile, c_tile=c_tile, c_valid=C, inv_c=1.0 / C,
        mask_c=(c_pad != C))

    cost = pl.CostEstimate(
        flops=int(2 * N * C * S + N * (2 * KS * KS * 2 * S + 4 * S)),
        transcendentals=int(2 * N * S),
        bytes_accessed=int(x.size * x.dtype.itemsize
                           + N * S * x.dtype.itemsize
                           + fc_w.size * 4 + fc_b.size * 4 + conv_w.size * 4))

    out = pl.pallas_call(
        kernel,
        out_shape=jax.ShapeDtypeStruct((num_n, n_tile, S), x.dtype),
        grid=(num_n, num_c),
        in_specs=[
            pl.BlockSpec((n_tile, c_tile, S), lambda n, c: (n, c, 0)),   # x
            pl.BlockSpec((2, S), lambda n, c: (0, 0)),                   # fc W
            pl.BlockSpec(memory_space=pltpu.MemorySpace.SMEM),           # fc b
            pl.BlockSpec(memory_space=pltpu.MemorySpace.SMEM),           # conv W
        ],
        out_specs=pl.BlockSpec((None, n_tile, S), lambda n, c: (n, 0, 0)),
        scratch_shapes=[pltpu.VMEM((n_tile, S), jnp.float32),
                        pltpu.VMEM((n_tile, S), jnp.float32)],
        compiler_params=pltpu.CompilerParams(
            dimension_semantics=("parallel", "arbitrary"),
            vmem_limit_bytes=32 * 1024 * 1024),
        cost_estimate=cost,
    )(x_r, fc_w_rows, fc_b_s, conv_w_flat)

    return out.reshape(n_pad, S)[:N].reshape(N, 1, H, W)


def reference(x, fc_w, fc_b, conv_w):
    """Pure-JAX reference matching the PyTorch forward."""
    avg = jnp.mean(x, axis=1, keepdims=True)
    mx = jnp.max(x, axis=1, keepdims=True)
    xc = jnp.concatenate([avg, mx], axis=1)
    logit = jnp.dot(xc.reshape(x.shape[0], -1), fc_w.T,
                    precision=lax.Precision.HIGHEST) + fc_b
    p_x = jax.nn.sigmoid(logit).reshape(-1, 1, 1, 1)
    conv = lax.conv_general_dilated(
        xc, conv_w, window_strides=(1, 1),
        padding=[(PAD, PAD), (PAD, PAD)],
        dimension_numbers=("NCHW", "OIHW", "NCHW"),
        precision=lax.Precision.HIGHEST)
    return jax.nn.sigmoid(conv) * p_x


if __name__ == "__main__":
    key = jax.random.PRNGKey(0)

    fan_in_fc = 2 * S
    b_fc = 1.0 / float(fan_in_fc) ** 0.5
    fan_in_conv = 2 * KS * KS
    b_cv = 1.0 / float(fan_in_conv) ** 0.5

    # (N, C, n_tile, c_tile): exercise single-step, multi-tile + padding/mask,
    # and in-block chunked (fori) reduction paths.
    configs = [
        (2, 4, None, None),
        (5, 20, 2, 8),
        (3, 44, None, None),
    ]
    for idx, (N, C, nt, ct) in enumerate(configs):
        kx, kfw, kfb, kcw, key = jax.random.split(key, 5)
        x = jax.random.normal(kx, (N, C, H, W), jnp.float32)
        fc_w = jax.random.uniform(kfw, (1, fan_in_fc), jnp.float32, -b_fc, b_fc)
        fc_b = jax.random.uniform(kfb, (1,), jnp.float32, -b_fc, b_fc)
        conv_w = jax.random.uniform(kcw, (1, 2, KS, KS), jnp.float32,
                                    -b_cv, b_cv)

        out = jax.block_until_ready(
            spatial_attention(x, fc_w, fc_b, conv_w, n_tile=nt, c_tile=ct))
        ref = reference(x, fc_w, fc_b, conv_w)

        assert out.shape == (N, 1, H, W), (idx, out.shape)
        err = float(jnp.max(jnp.abs(out - ref)))
        assert err < 1e-5, (idx, err)

    print("KERNEL_OK")
</pallas_src>

<mosaic_0001>
module attributes {stable_mosaic.version = 11 : i64} {
  func.func @_spatial_attention_kernel(%arg0: i32, %arg1: i32, %arg2: memref<2x4x49xf32, #tpu.memory_space<vmem>>, %arg3: memref<2x49xf32, #tpu.memory_space<vmem>>, %arg4: memref<1xf32, #tpu.memory_space<smem>>, %arg5: memref<18xf32, #tpu.memory_space<smem>>, %arg6: memref<1x2x49xf32, #tpu.memory_space<vmem>>, %arg7: memref<2x49xf32, #tpu.memory_space<vmem>>, %arg8: memref<2x49xf32, #tpu.memory_space<vmem>>) attributes {dimension_semantics = [#tpu.dimension_semantics<parallel>, #tpu.dimension_semantics<arbitrary>], iteration_bounds = array<i64: 1, 1>, scalar_prefetch = 0 : i64, scratch_operands = 2 : i64, tpu.core_type = #tpu.core_type<tc>, window_params = [{transform_indices = @transform_0, window_bounds = array<i64: 2, 4, 49>}, {pipeline_mode = #tpu.pipeline_mode<synchronous>, transform_indices = @transform_1, window_bounds = array<i64: 2, 49>}, {transform_indices = @transform_2, window_bounds = array<i64: 1>}, {transform_indices = @transform_3, window_bounds = array<i64: 18>}, {transform_indices = @transform_4, window_bounds = array<i64: 1, 2, 49>}]} {
    %c0_i32 = arith.constant 0 : i32
    %0 = arith.cmpi eq, %arg1, %c0_i32 : i32
    %1 = arith.extui %0 : i1 to i32
    %c0_i32_0 = arith.constant 0 : i32
    %2 = arith.cmpi ne, %1, %c0_i32_0 : i32
    scf.if %2 {
      %cst_16 = arith.constant 0.000000e+00 : f32
      %19 = vector.broadcast %cst_16 : f32 to vector<2x49xf32>
      %c0_17 = arith.constant 0 : index
      %c0_18 = arith.constant 0 : index
      %20 = vector.load %arg7[%c0_17, %c0_18] : memref<2x49xf32, #tpu.memory_space<vmem>>, vector<2x49xf32>
      tpu.vector_store %arg7[%c0_17, %c0_18], %19 {strides = array<i32>} : memref<2x49xf32, #tpu.memory_space<vmem>>, vector<2x49xf32>,
      %cst_19 = arith.constant 0xFF800000 : f32
      %21 = vector.broadcast %cst_19 : f32 to vector<2x49xf32>
      %c0_20 = arith.constant 0 : index
      %c0_21 = arith.constant 0 : index
      %22 = vector.load %arg8[%c0_20, %c0_21] : memref<2x49xf32, #tpu.memory_space<vmem>>, vector<2x49xf32>
      tpu.vector_store %arg8[%c0_20, %c0_21], %21 {strides = array<i32>} : memref<2x49xf32, #tpu.memory_space<vmem>>, vector<2x49xf32>,
    } else {
    }
    %cst = arith.constant 0.000000e+00 : f32
    %3 = vector.broadcast %cst : f32 to vector<2x49xf32>
    %cst_1 = arith.constant 0xFF800000 : f32
    %4 = vector.broadcast %cst_1 : f32 to vector<2x49xf32>
    %c0 = arith.constant 0 : index
    %c0_2 = arith.constant 0 : index
    %c0_3 = arith.constant 0 : index
    %5 = vector.load %arg2[%c0, %c0_2, %c0_3] : memref<2x4x49xf32, #tpu.memory_space<vmem>>, vector<2x4x49xf32>
    %cst_4 = arith.constant dense<0.000000e+00> : vector<2x49xf32>
    %6 = vector.multi_reduction <add>, %5, %cst_4 [1] : vector<2x4x49xf32> to vector<2x49xf32>
    %7 = arith.addf %3, %6 : vector<2x49xf32>
    %cst_5 = arith.constant dense<0xFF800000> : vector<2x49xf32>
    %8 = vector.multi_reduction <maximumf>, %5, %cst_5 [1] : vector<2x4x49xf32> to vector<2x49xf32>
    %9 = arith.maximumf %4, %8 : vector<2x49xf32>
    %c0_6 = arith.constant 0 : index
    %c0_7 = arith.constant 0 : index
    %10 = vector.load %arg7[%c0_6, %c0_7] : memref<2x49xf32, #tpu.memory_space<vmem>>, vector<2x49xf32>
    %11 = arith.addf %10, %7 : vector<2x49xf32>
    %c0_8 = arith.constant 0 : index
    %c0_9 = arith.constant 0 : index
    %12 = vector.load %arg7[%c0_8, %c0_9] : memref<2x49xf32, #tpu.memory_space<vmem>>, vector<2x49xf32>
    tpu.vector_store %arg7[%c0_8, %c0_9], %11 {strides = array<i32>} : memref<2x49xf32, #tpu.memory_space<vmem>>, vector<2x49xf32>,
    %c0_10 = arith.constant 0 : index
    %c0_11 = arith.constant 0 : index
    %13 = vector.load %arg8[%c0_10, %c0_11] : memref<2x49xf32, #tpu.memory_space<vmem>>, vector<2x49xf32>
    %14 = arith.maximumf %13, %9 : vector<2x49xf32>
    %c0_12 = arith.constant 0 : index
    %c0_13 = arith.constant 0 : index
    %15 = vector.load %arg8[%c0_12, %c0_13] : memref<2x49xf32, #tpu.memory_space<vmem>>, vector<2x49xf32>
    tpu.vector_store %arg8[%c0_12, %c0_13], %14 {strides = array<i32>} : memref<2x49xf32, #tpu.memory_space<vmem>>, vector<2x49xf32>,
    %c0_i32_14 = arith.constant 0 : i32
    %16 = arith.cmpi eq, %arg1, %c0_i32_14 : i32
    %17 = arith.extui %16 : i1 to i32
    %c0_i32_15 = arith.constant 0 : i32
    %18 = arith.cmpi ne, %17, %c0_i32_15 : i32
    scf.if %18 {
      %c0_16 = arith.constant 0 : index
      %c0_17 = arith.constant 0 : index
      %19 = vector.load %arg7[%c0_16, %c0_17] : memref<2x49xf32, #tpu.memory_space<vmem>>, vector<2x49xf32>
      %cst_18 = arith.constant 2.500000e-01 : f32
      %20 = vector.broadcast %cst_18 : f32 to vector<2x49xf32>
      %21 = arith.mulf %19, %20 : vector<2x49xf32>
      %c0_19 = arith.constant 0 : index
      %c0_20 = arith.constant 0 : index
      %22 = vector.load %arg8[%c0_19, %c0_20] : memref<2x49xf32, #tpu.memory_space<vmem>>, vector<2x49xf32>
      %c0_21 = arith.constant 0 : index
      %c0_22 = arith.constant 0 : index
      %23 = vector.load %arg3[%c0_21, %c0_22] : memref<2x49xf32, #tpu.memory_space<vmem>>, vector<2x49xf32>
      %24 = vector.extract_strided_slice %23 {offsets = [0, 0], sizes = [1, 49], strides = [1, 1]} : vector<2x49xf32> to vector<1x49xf32>
      %25 = vector.broadcast %24 : vector<1x49xf32> to vector<2x49xf32>
      %26 = arith.mulf %21, %25 : vector<2x49xf32>
      %27 = vector.extract_strided_slice %23 {offsets = [1, 0], sizes = [1, 49], strides = [1, 1]} : vector<2x49xf32> to vector<1x49xf32>
      %28 = vector.broadcast %27 : vector<1x49xf32> to vector<2x49xf32>
      %29 = arith.mulf %22, %28 : vector<2x49xf32>
      %30 = arith.addf %26, %29 : vector<2x49xf32>
      %cst_23 = arith.constant dense<0.000000e+00> : vector<2xf32>
      %31 = vector.multi_reduction <add>, %30, %cst_23 [1] : vector<2x49xf32> to vector<2xf32>
      %32 = vector.shape_cast %31 : vector<2xf32> to vector<2x1xf32>
      %c0_24 = arith.constant 0 : index
      %33 = memref.load %arg4[%c0_24] : memref<1xf32, #tpu.memory_space<smem>>
      %34 = vector.broadcast %33 : f32 to vector<2x1xf32>
      %35 = arith.addf %32, %34 : vector<2x1xf32>
      %36 = arith.negf %35 : vector<2x1xf32>
      %37 = math.exp %36 : vector<2x1xf32>
      %cst_25 = arith.constant 1.000000e+00 : f32
      %38 = vector.broadcast %cst_25 : f32 to vector<2x1xf32>
      %39 = arith.addf %38, %37 : vector<2x1xf32>
      %40 = arith.divf %38, %39 : vector<2x1xf32>
      %cst_26 = arith.constant 0.000000e+00 : f32
      %41 = vector.broadcast %cst_26 : f32 to vector<2x8xf32>
      %42 = tpu.concatenate %41, %21, %41 in 1 : vector<2x8xf32>, vector<2x49xf32>, vector<2x8xf32> -> vector<2x65xf32>
      %43 = tpu.concatenate %41, %22, %41 in 1 : vector<2x8xf32>, vector<2x49xf32>, vector<2x8xf32> -> vector<2x65xf32>
      %44 = tpu.iota {dimensions = array<i32: 1>} : vector<1x49xi32>
      %c7_i32 = arith.constant 7 : i32
      %c0_i32_27 = arith.constant 0 : i32
      %45 = arith.cmpi eq, %c7_i32, %c0_i32_27 : i32
      %c1_i32 = arith.constant 1 : i32
      %46 = arith.select %45, %c1_i32, %c7_i32 : i32
      %47 = vector.broadcast %46 : i32 to vector<1x49xi32>
      %48 = arith.remsi %44, %47 : vector<1x49xi32>
      %c0_i32_28 = arith.constant 0 : i32
      %49 = vector.broadcast %c0_i32_28 : i32 to vector<1x49xi32>
      %50 = arith.cmpi ne, %48, %49 : vector<1x49xi32>
      %c0_i32_29 = arith.constant 0 : i32
      %51 = vector.broadcast %c0_i32_29 : i32 to vector<1x49xi32>
      %52 = arith.cmpi slt, %48, %51 : vector<1x49xi32>
      %c0_i32_30 = arith.constant 0 : i32
      %53 = arith.cmpi slt, %46, %c0_i32_30 : i32
      %54 = vector.broadcast %53 : i1 to vector<1x49xi1>
      %55 = vector.broadcast %54 : vector<1x49xi1> to vector<1x49xi1>
      %56 = arith.xori %52, %55 : vector<1x49xi1>
      %57 = arith.andi %56, %50 : vector<1x49xi1>
      %58 = vector.broadcast %46 : i32 to vector<1x49xi32>
      %59 = arith.addi %48, %58 : vector<1x49xi32>
      %60 = arith.select %57, %59, %48 : vector<1x49xi1>, vector<1x49xi32>
      %c1_i32_31 = arith.constant 1 : i32
      %61 = vector.broadcast %c1_i32_31 : i32 to vector<1x49xi32>
      %62 = arith.cmpi sge, %60, %61 : vector<1x49xi32>
      %c5_i32 = arith.constant 5 : i32
      %63 = vector.broadcast %c5_i32 : i32 to vector<1x49xi32>
      %64 = arith.cmpi sle, %60, %63 : vector<1x49xi32>
      %cst_32 = arith.constant 0.000000e+00 : f32
      %65 = vector.broadcast %cst_32 : f32 to vector<2x49xf32>
      %c0_33 = arith.constant 0 : index
      %66 = memref.load %arg5[%c0_33] : memref<18xf32, #tpu.memory_space<smem>>
      %67 = vector.extract_strided_slice %42 {offsets = [0, 0], sizes = [2, 49], strides = [1, 1]} : vector<2x65xf32> to vector<2x49xf32>
      %cst_34 = arith.constant 0.000000e+00 : f32
      %68 = vector.shape_cast %62 : vector<1x49xi1> to vector<1x49xi1>
      %69 = vector.broadcast %68 : vector<1x49xi1> to vector<2x49xi1>
      %70 = vector.broadcast %cst_34 : f32 to vector<2x49xf32>
      %71 = arith.select %69, %67, %70 : vector<2x49xi1>, vector<2x49xf32>
      %72 = vector.broadcast %66 : f32 to vector<2x49xf32>
      %73 = arith.mulf %72, %71 : vector<2x49xf32>
      %74 = arith.addf %65, %73 : vector<2x49xf32>
      %c1 = arith.constant 1 : index
      %75 = memref.load %arg5[%c1] : memref<18xf32, #tpu.memory_space<smem>>
      %76 = vector.extract_strided_slice %42 {offsets = [0, 1], sizes = [2, 49], strides = [1, 1]} : vector<2x65xf32> to vector<2x49xf32>
      %77 = vector.broadcast %75 : f32 to vector<2x49xf32>
      %78 = arith.mulf %77, %76 : vector<2x49xf32>
      %79 = arith.addf %74, %78 : vector<2x49xf32>
      %c2 = arith.constant 2 : index
      %80 = memref.load %arg5[%c2] : memref<18xf32, #tpu.memory_space<smem>>
      %81 = vector.extract_strided_slice %42 {offsets = [0, 2], sizes = [2, 49], strides = [1, 1]} : vector<2x65xf32> to vector<2x49xf32>
      %cst_35 = arith.constant 0.000000e+00 : f32
      %82 = vector.shape_cast %64 : vector<1x49xi1> to vector<1x49xi1>
      %83 = vector.broadcast %82 : vector<1x49xi1> to vector<2x49xi1>
      %84 = vector.broadcast %cst_35 : f32 to vector<2x49xf32>
      %85 = arith.select %83, %81, %84 : vector<2x49xi1>, vector<2x49xf32>
      %86 = vector.broadcast %80 : f32 to vector<2x49xf32>
      %87 = arith.mulf %86, %85 : vector<2x49xf32>
      %88 = arith.addf %79, %87 : vector<2x49xf32>
      %c3 = arith.constant 3 : index
      %89 = memref.load %arg5[%c3] : memref<18xf32, #tpu.memory_space<smem>>
      %90 = vector.extract_strided_slice %42 {offsets = [0, 7], sizes = [2, 49], strides = [1, 1]} : vector<2x65xf32> to vector<2x49xf32>
      %cst_36 = arith.constant 0.000000e+00 : f32
      %91 = vector.shape_cast %62 : vector<1x49xi1> to vector<1x49xi1>
      %92 = vector.broadcast %91 : vector<1x49xi1> to vector<2x49xi1>
      %93 = vector.broadcast %cst_36 : f32 to vector<2x49xf32>
      %94 = arith.select %92, %90, %93 : vector<2x49xi1>, vector<2x49xf32>
      %95 = vector.broadcast %89 : f32 to vector<2x49xf32>
      %96 = arith.mulf %95, %94 : vector<2x49xf32>
      %97 = arith.addf %88, %96 : vector<2x49xf32>
      %c4 = arith.constant 4 : index
      %98 = memref.load %arg5[%c4] : memref<18xf32, #tpu.memory_space<smem>>
      %99 = vector.extract_strided_slice %42 {offsets = [0, 8], sizes = [2, 49], strides = [1, 1]} : vector<2x65xf32> to vector<2x49xf32>
      %100 = vector.broadcast %98 : f32 to vector<2x49xf32>
      %101 = arith.mulf %100, %99 : vector<2x49xf32>
      %102 = arith.addf %97, %101 : vector<2x49xf32>
      %c5 = arith.constant 5 : index
      %103 = memref.load %arg5[%c5] : memref<18xf32, #tpu.memory_space<smem>>
      %104 = vector.extract_strided_slice %42 {offsets = [0, 9], sizes = [2, 49], strides = [1, 1]} : vector<2x65xf32> to vector<2x49xf32>
      %cst_37 = arith.constant 0.000000e+00 : f32
      %105 = vector.shape_cast %64 : vector<1x49xi1> to vector<1x49xi1>
      %106 = vector.broadcast %105 : vector<1x49xi1> to vector<2x49xi1>
      %107 = vector.broadcast %cst_37 : f32 to vector<2x49xf32>
      %108 = arith.select %106, %104, %107 : vector<2x49xi1>, vector<2x49xf32>
      %109 = vector.broadcast %103 : f32 to vector<2x49xf32>
      %110 = arith.mulf %109, %108 : vector<2x49xf32>
      %111 = arith.addf %102, %110 : vector<2x49xf32>
      %c6 = arith.constant 6 : index
      %112 = memref.load %arg5[%c6] : memref<18xf32, #tpu.memory_space<smem>>
      %113 = vector.extract_strided_slice %42 {offsets = [0, 14], sizes = [2, 49], strides = [1, 1]} : vector<2x65xf32> to vector<2x49xf32>
      %cst_38 = arith.constant 0.000000e+00 : f32
      %114 = vector.shape_cast %62 : vector<1x49xi1> to vector<1x49xi1>
      %115 = vector.broadcast %114 : vector<1x49xi1> to vector<2x49xi1>
      %116 = vector.broadcast %cst_38 : f32 to vector<2x49xf32>
      %117 = arith.select %115, %113, %116 : vector<2x49xi1>, vector<2x49xf32>
      %118 = vector.broadcast %112 : f32 to vector<2x49xf32>
      %119 = arith.mulf %118, %117 : vector<2x49xf32>
      %120 = arith.addf %111, %119 : vector<2x49xf32>
      %c7 = arith.constant 7 : index
      %121 = memref.load %arg5[%c7] : memref<18xf32, #tpu.memory_space<smem>>
      %122 = vector.extract_strided_slice %42 {offsets = [0, 15], sizes = [2, 49], strides = [1, 1]} : vector<2x65xf32> to vector<2x49xf32>
      %123 = vector.broadcast %121 : f32 to vector<2x49xf32>
      %124 = arith.mulf %123, %122 : vector<2x49xf32>
      %125 = arith.addf %120, %124 : vector<2x49xf32>
      %c8 = arith.constant 8 : index
      %126 = memref.load %arg5[%c8] : memref<18xf32, #tpu.memory_space<smem>>
      %127 = vector.extract_strided_slice %42 {offsets = [0, 16], sizes = [2, 49], strides = [1, 1]} : vector<2x65xf32> to vector<2x49xf32>
      %cst_39 = arith.constant 0.000000e+00 : f32
      %128 = vector.shape_cast %64 : vector<1x49xi1> to vector<1x49xi1>
      %129 = vector.broadcast %128 : vector<1x49xi1> to vector<2x49xi1>
      %130 = vector.broadcast %cst_39 : f32 to vector<2x49xf32>
      %131 = arith.select %129, %127, %130 : vector<2x49xi1>, vector<2x49xf32>
      %132 = vector.broadcast %126 : f32 to vector<2x49xf32>
      %133 = arith.mulf %132, %131 : vector<2x49xf32>
      %134 = arith.addf %125, %133 : vector<2x49xf32>
      %c9 = arith.constant 9 : index
      %135 = memref.load %arg5[%c9] : memref<18xf32, #tpu.memory_space<smem>>
      %136 = vector.extract_strided_slice %43 {offsets = [0, 0], sizes = [2, 49], strides = [1, 1]} : vector<2x65xf32> to vector<2x49xf32>
      %cst_40 = arith.constant 0.000000e+00 : f32
      %137 = vector.shape_cast %62 : vector<1x49xi1> to vector<1x49xi1>
      %138 = vector.broadcast %137 : vector<1x49xi1> to vector<2x49xi1>
      %139 = vector.broadcast %cst_40 : f32 to vector<2x49xf32>
      %140 = arith.select %138, %136, %139 : vector<2x49xi1>, vector<2x49xf32>
      %141 = vector.broadcast %135 : f32 to vector<2x49xf32>
      %142 = arith.mulf %141, %140 : vector<2x49xf32>
      %143 = arith.addf %134, %142 : vector<2x49xf32>
      %c10 = arith.constant 10 : index
      %144 = memref.load %arg5[%c10] : memref<18xf32, #tpu.memory_space<smem>>
      %145 = vector.extract_strided_slice %43 {offsets = [0, 1], sizes = [2, 49], strides = [1, 1]} : vector<2x65xf32> to vector<2x49xf32>
      %146 = vector.broadcast %144 : f32 to vector<2x49xf32>
      %147 = arith.mulf %146, %145 : vector<2x49xf32>
      %148 = arith.addf %143, %147 : vector<2x49xf32>
      %c11 = arith.constant 11 : index
      %149 = memref.load %arg5[%c11] : memref<18xf32, #tpu.memory_space<smem>>
      %150 = vector.extract_strided_slice %43 {offsets = [0, 2], sizes = [2, 49], strides = [1, 1]} : vector<2x65xf32> to vector<2x49xf32>
      %cst_41 = arith.constant 0.000000e+00 : f32
      %151 = vector.shape_cast %64 : vector<1x49xi1> to vector<1x49xi1>
      %152 = vector.broadcast %151 : vector<1x49xi1> to vector<2x49xi1>
      %153 = vector.broadcast %cst_41 : f32 to vector<2x49xf32>
      %154 = arith.select %152, %150, %153 : vector<2x49xi1>, vector<2x49xf32>
      %155 = vector.broadcast %149 : f32 to vector<2x49xf32>
      %156 = arith.mulf %155, %154 : vector<2x49xf32>
      %157 = arith.addf %148, %156 : vector<2x49xf32>
      %c12 = arith.constant 12 : index
      %158 = memref.load %arg5[%c12] : memref<18xf32, #tpu.memory_space<smem>>
      %159 = vector.extract_strided_slice %43 {offsets = [0, 7], sizes = [2, 49], strides = [1, 1]} : vector<2x65xf32> to vector<2x49xf32>
      %cst_42 = arith.constant 0.000000e+00 : f32
      %160 = vector.shape_cast %62 : vector<1x49xi1> to vector<1x49xi1>
      %161 = vector.broadcast %160 : vector<1x49xi1> to vector<2x49xi1>
      %162 = vector.broadcast %cst_42 : f32 to vector<2x49xf32>
      %163 = arith.select %161, %159, %162 : vector<2x49xi1>, vector<2x49xf32>
      %164 = vector.broadcast %158 : f32 to vector<2x49xf32>
      %165 = arith.mulf %164, %163 : vector<2x49xf32>
      %166 = arith.addf %157, %165 : vector<2x49xf32>
      %c13 = arith.constant 13 : index
      %167 = memref.load %arg5[%c13] : memref<18xf32, #tpu.memory_space<smem>>
      %168 = vector.extract_strided_slice %43 {offsets = [0, 8], sizes = [2, 49], strides = [1, 1]} : vector<2x65xf32> to vector<2x49xf32>
      %169 = vector.broadcast %167 : f32 to vector<2x49xf32>
      %170 = arith.mulf %169, %168 : vector<2x49xf32>
      %171 = arith.addf %166, %170 : vector<2x49xf32>
      %c14 = arith.constant 14 : index
      %172 = memref.load %arg5[%c14] : memref<18xf32, #tpu.memory_space<smem>>
      %173 = vector.extract_strided_slice %43 {offsets = [0, 9], sizes = [2, 49], strides = [1, 1]} : vector<2x65xf32> to vector<2x49xf32>
      %cst_43 = arith.constant 0.000000e+00 : f32
      %174 = vector.shape_cast %64 : vector<1x49xi1> to vector<1x49xi1>
      %175 = vector.broadcast %174 : vector<1x49xi1> to vector<2x49xi1>
      %176 = vector.broadcast %cst_43 : f32 to vector<2x49xf32>
      %177 = arith.select %175, %173, %176 : vector<2x49xi1>, vector<2x49xf32>
      %178 = vector.broadcast %172 : f32 to vector<2x49xf32>
      %179 = arith.mulf %178, %177 : vector<2x49xf32>
      %180 = arith.addf %171, %179 : vector<2x49xf32>
      %c15 = arith.constant 15 : index
      %181 = memref.load %arg5[%c15] : memref<18xf32, #tpu.memory_space<smem>>
      %182 = vector.extract_strided_slice %43 {offsets = [0, 14], sizes = [2, 49], strides = [1, 1]} : vector<2x65xf32> to vector<2x49xf32>
      %cst_44 = arith.constant 0.000000e+00 : f32
      %183 = vector.shape_cast %62 : vector<1x49xi1> to vector<1x49xi1>
      %184 = vector.broadcast %183 : vector<1x49xi1> to vector<2x49xi1>
      %185 = vector.broadcast %cst_44 : f32 to vector<2x49xf32>
      %186 = arith.select %184, %182, %185 : vector<2x49xi1>, vector<2x49xf32>
      %187 = vector.broadcast %181 : f32 to vector<2x49xf32>
      %188 = arith.mulf %187, %186 : vector<2x49xf32>
      %189 = arith.addf %180, %188 : vector<2x49xf32>
      %c16 = arith.constant 16 : index
      %190 = memref.load %arg5[%c16] : memref<18xf32, #tpu.memory_space<smem>>
      %191 = vector.extract_strided_slice %43 {offsets = [0, 15], sizes = [2, 49], strides = [1, 1]} : vector<2x65xf32> to vector<2x49xf32>
      %192 = vector.broadcast %190 : f32 to vector<2x49xf32>
      %193 = arith.mulf %192, %191 : vector<2x49xf32>
      %194 = arith.addf %189, %193 : vector<2x49xf32>
      %c17 = arith.constant 17 : index
      %195 = memref.load %arg5[%c17] : memref<18xf32, #tpu.memory_space<smem>>
      %196 = vector.extract_strided_slice %43 {offsets = [0, 16], sizes = [2, 49], strides = [1, 1]} : vector<2x65xf32> to vector<2x49xf32>
      %cst_45 = arith.constant 0.000000e+00 : f32
      %197 = vector.shape_cast %64 : vector<1x49xi1> to vector<1x49xi1>
      %198 = vector.broadcast %197 : vector<1x49xi1> to vector<2x49xi1>
      %199 = vector.broadcast %cst_45 : f32 to vector<2x49xf32>
      %200 = arith.select %198, %196, %199 : vector<2x49xi1>, vector<2x49xf32>
      %201 = vector.broadcast %195 : f32 to vector<2x49xf32>
      %202 = arith.mulf %201, %200 : vector<2x49xf32>
      %203 = arith.addf %194, %202 : vector<2x49xf32>
      %204 = arith.negf %203 : vector<2x49xf32>
      %205 = math.exp %204 : vector<2x49xf32>
      %cst_46 = arith.constant 1.000000e+00 : f32
      %206 = vector.broadcast %cst_46 : f32 to vector<2x49xf32>
      %207 = arith.addf %206, %205 : vector<2x49xf32>
      %208 = arith.divf %206, %207 : vector<2x49xf32>
      %209 = vector.broadcast %40 : vector<2x1xf32> to vector<2x49xf32>
      %210 = arith.mulf %208, %209 : vector<2x49xf32>
      %c0_47 = arith.constant 0 : index
      %c0_48 = arith.constant 0 : index
      %c0_49 = arith.constant 0 : index
      %211 = vector.load %arg6[%c0_47, %c0_48, %c0_49] : memref<1x2x49xf32, #tpu.memory_space<vmem>>, vector<1x2x49xf32>
      %212 = vector.shape_cast %211 : vector<1x2x49xf32> to vector<2x49xf32>
      %213 = vector.shape_cast %210 : vector<2x49xf32> to vector<1x2x49xf32>
      tpu.vector_store %arg6[%c0_47, %c0_48, %c0_49], %213 {strides = array<i32>} : memref<1x2x49xf32, #tpu.memory_space<vmem>>, vector<1x2x49xf32>,
    } else {
    }
    return
  }
  func.func @transform_0(%arg0: i32, %arg1: i32) -> (i32, i32, i32) {
    %c0_i32 = arith.constant 0 : i32
    %c0_i32_0 = arith.constant 0 : i32
    return %arg0, %arg1, %c0_i32 : i32, i32, i32
  }
  func.func @transform_1(%arg0: i32, %arg1: i32) -> (i32, i32) {
    %c0_i32 = arith.constant 0 : i32
    %c0_i32_0 = arith.constant 0 : i32
    %c0_i32_1 = arith.constant 0 : i32
    return %c0_i32, %c0_i32_0 : i32, i32
  }
  func.func @transform_2(%arg0: i32, %arg1: i32) -> i32 {
    %c0_i32 = arith.constant 0 : i32
    %c0_i32_0 = arith.constant 0 : i32
    return %c0_i32 : i32
  }
  func.func @transform_3(%arg0: i32, %arg1: i32) -> i32 {
    %c0_i32 = arith.constant 0 : i32
    %c0_i32_0 = arith.constant 0 : i32
    return %c0_i32 : i32
  }
  func.func @transform_4(%arg0: i32, %arg1: i32) -> (i32, i32, i32) {
    %c0_i32 = arith.constant 0 : i32
    %c0_i32_0 = arith.constant 0 : i32
    %c0_i32_1 = arith.constant 0 : i32
    return %arg0, %c0_i32, %c0_i32_0 : i32, i32, i32
  }
}

</mosaic_0001>

<llo_original>
// kernel: tpu_custom_call.1
$region0: #{tpu_custom_call.1}
  #allocation0 [shape = 'u32[]', space=smem, size = 0x4, offset = 0x4, fixed_abs, tag = 'smem constant byte address 0x4 - core index']
  #allocation1 [shape = 'u32[144,128]{1,0:T(1,128)}', space=vmem, size = 0x12000, scoped, tag = 'internal scratch']
  #allocation2 [shape = 'f32[2,49]{1,0:T(2,128)}', space=vmem, size = 0x400, scoped, tag = 'scratch operand']
  #allocation3 [shape = 'f32[2,49]{1,0:T(2,128)}', space=vmem, size = 0x400, scoped, tag = 'scratch operand']
  #allocation4 [shape = 'f32[1]{0:T(128)S(6)}', space=smem, size = 0x200, scoped, tag = 'scoped memory for tpu_custom_call.1']
  %s0 = inlined_call_operand.hbm [shape: f32[2,4,49], index: 0, kind: input, shape index: {}]
  %s1 = inlined_call_operand.vmem [shape: f32[2,49], index: 1, kind: input, shape index: {}]
  %s2 = inlined_call_operand.<no memory space> [shape: f32[1], index: 2, kind: input, shape index: {}]
  %s3 = inlined_call_operand.vmem [shape: f32[18], index: 3, kind: input, shape index: {}]
  %s4 = inlined_call_operand.hbm [shape: f32[1,2,49], index: 4, kind: output, shape index: {}]
  %s5 = sld [smem:[#allocation0]]
  $region42: #{tpu_custom_call.1} parent=0
    _
  %s7 = ssub.s32 1, %s5
  %s8 = scalar_select 0, %s7, %s5
  %9 = sst [smem:[#allocation4]] %s2
  $region1: #{tpu_custom_call.1} parent=0
    #allocation5 [shape = 'u8[4096]{0}', space=vmem, size = 0x1000, scoped, tag = 'input window, operand 0, single buffered']
    #allocation6 [shape = 's32[1]{0}', space=sflag, size = 0x4, scoped, tag = 'scoped memory for tpu_custom_call.1']
    #allocation7 [shape = 's32[1]{0}', space=sflag, size = 0x4, scoped, tag = 'scoped memory for tpu_custom_call.1']
    #allocation8 [shape = 's32[1]{0}', space=sflag, size = 0x4, scoped, tag = 'scoped memory for tpu_custom_call.1']
    #allocation9 [shape = 'u8[512]{0}', space=smem, size = 0x200, scoped, tag = 'input window, operand 3, single buffered']
    #allocation10 [shape = 'u8[1024]{0}', space=vmem, size = 0x400, scoped, tag = 'output window, operand 0, single buffered']
    %10 = vsyncpa [#allocation6], 0
    %11 = vsyncpa [#allocation8], 0
    %12 = vsyncpa [#allocation7], 0
    // Predicated region
    $region2: #{tpu_custom_call.1} parent=1 // pred_check
      _
    $region3: #{tpu_custom_call.1} parent=1 // pred_check_branch
      %14 = sbr.rel (0) target = $region5
    $region4: #{tpu_custom_call.1} parent=1 // pred_region
      %s16 = ssub.s32 128, 128
      %17 = vsyncadd [#allocation6], %s16
      %s18 = sshll.u32 [#allocation5], 4
      %s19 = int_to_ptr.vmem [resolvable:$true] %s18
      %24 = dma.hbm_to_vmem [thread:$0]  %s0, 128, %s19, [#allocation6], 64, 64, 4
    $region5: #{tpu_custom_call.1} parent=1 // pred_fallthru
      _
    // Predicated region
    $region6: #{tpu_custom_call.1} parent=1 // pred_check
      _
    $region7: #{tpu_custom_call.1} parent=1 // pred_check_branch
      %26 = sbr.rel (0) target = $region9
    $region8: #{tpu_custom_call.1} parent=1 // pred_region
      _
    $region9: #{tpu_custom_call.1} parent=1 // pred_fallthru
      _
    // Predicated region
    $region10: #{tpu_custom_call.1} parent=1 // pred_check
      _
    $region11: #{tpu_custom_call.1} parent=1 // pred_check_branch
      %28 = sbr.rel (0) target = $region13
    $region12: #{tpu_custom_call.1} parent=1 // pred_region
      _
    $region13: #{tpu_custom_call.1} parent=1 // pred_fallthru
      _
    // Predicated region
    $region14: #{tpu_custom_call.1} parent=1 // pred_check
      _
    $region15: #{tpu_custom_call.1} parent=1 // pred_check_branch
      %30 = sbr.rel (0) target = $region17
    $region16: #{tpu_custom_call.1} parent=1 // pred_region
      %s32 = ssub.s32 16, 16
      %33 = vsyncadd [#allocation8], %s32
      %s35 = sshll.u32 %s3, 4
      %s36 = int_to_ptr.vmem [resolvable:$true] %s35
      %38 = dma.vmem_to_smem %s36, 16, [#allocation9], [#allocation8]
    $region17: #{tpu_custom_call.1} parent=1 // pred_fallthru
      _
    // Predicated region
    $region18: #{tpu_custom_call.1} parent=1 // pred_check
      _
    $region19: #{tpu_custom_call.1} parent=1 // pred_check_branch
      %40 = sbr.rel (0) target = $region21
    $region20: #{tpu_custom_call.1} parent=1 // pred_region
      %41 = dma.done [#allocation6], 128
    $region21: #{tpu_custom_call.1} parent=1 // pred_fallthru
      _
    // Predicated region
    $region22: #{tpu_custom_call.1} parent=1 // pred_check
      _
    $region23: #{tpu_custom_call.1} parent=1 // pred_check_branch
      %43 = sbr.rel (0) target = $region25
    $region24: #{tpu_custom_call.1} parent=1 // pred_region
      %44 = dma.done [#allocation8], 16
    $region25: #{tpu_custom_call.1} parent=1 // pred_fallthru
      _
    %45 = sfence
    %p46 = scmp.eq.s32.totalorder 0, 0
    // Predicated region
    $region26: #{tpu_custom_call.1} parent=1 // pred_check
      %p47 = pneg %p46
    $region27: #{tpu_custom_call.1} parent=1 // pred_check_branch
      %49 = sbr.rel (%p47) target = $region29
    $region28: #{tpu_custom_call.1} parent=1 // pred_region
      %vm50 = vcmask 394240
      %51 = vst.msk [vmem:[#allocation2] sm:$0x3] %vm50, 0.0
      %52 = vst.msk [vmem:[#allocation3] sm:$0x3] %vm50, -inf
    $region29: #{tpu_custom_call.1} parent=1 // pred_fallthru
      _
    %v53 = vld [vmem:[#allocation5] sm:$0xf]
    %v54 = vld [vmem:[#allocation5 + $0x4] sm:$0xf]
    %vm55 = vcmask 396288
    %v56 = vsel %vm55, %v53, 0.0
    %v57 = vrot.slane %v56, 4
    %v58 = vadd.f32 %v56, %v57
    %v59 = vrot.slane %v58, 2
    %v60 = vadd.f32 %v58, %v59
    %v61 = vrot.slane %v60, 1
    %v62 = vadd.f32 %v60, %v61
    %v63 = vsel %vm55, %v54, 0.0
    %v64 = vrot.slane %v63, 4
    %v65 = vadd.f32 %v63, %v64
    %v66 = vrot.slane %v65, 2
    %v67 = vadd.f32 %v65, %v66
    %v68 = vrot.slane %v67, 1
    %v69 = vadd.f32 %v67, %v68
    %v70 = vadd.f32 %v62, 0.0
    %v71 = vadd.f32 %v69, 0.0
    %v72 = vsel %vm55, %v53, -inf
    %v73 = vrot.slane %v72, 4
    %v74 = vmax.f32 %v72, %v73
    %v75 = vrot.slane %v74, 2
    %v76 = vmax.f32 %v74, %v75
    %v77 = vrot.slane %v76, 1
    %v78 = vmax.f32 %v76, %v77
    %v79 = vsel %vm55, %v54, -inf
    %v80 = vrot.slane %v79, 4
    %v81 = vmax.f32 %v79, %v80
    %v82 = vrot.slane %v81, 2
    %v83 = vmax.f32 %v81, %v82
    %v84 = vrot.slane %v83, 1
    %v85 = vmax.f32 %v83, %v84
    %v86 = vld [vmem:[#allocation2] sm:$0x3]
    %vm89 = vcmask 1041409
    %v90 = vsel %vm89, %v71, %v70
    %v92 = vadd.f32 %v86, %v90
    %vm93 = vcmask 394240
    %94 = vst.msk [vmem:[#allocation2] sm:$0x3] %vm93, %v92
    %v95 = vld [vmem:[#allocation3] sm:$0x3]
    %v98 = vsel %vm89, %v85, %v78
    %v100 = vmax.f32 %v95, %v98
    %101 = vst.msk [vmem:[#allocation3] sm:$0x3] %vm93, %v100
    // Predicated region
    $region30: #{tpu_custom_call.1} parent=1 // pred_check
      %p102 = pneg %p46
    $region31: #{tpu_custom_call.1} parent=1 // pred_check_branch
      %104 = sbr.rel (%p102) target = $region33
    $region32: #{tpu_custom_call.1} parent=1 // pred_region
      %v105 = vld [vmem:[#allocation2] sm:$0x3]
      %v106 = vmul.f32 %v105, 0.25
      %v107 = vld [vmem:[#allocation3] sm:$0x3]
      %v108 = vld [vmem:[%s1] sm:$0x3]
      %v109 = vlaneseq
      %v110 = vshrl.u32 %v109, 7
      %v111 = vsub.s32 0, %v110
      %v112 = vrot.slane %v108, %v111
      %v113 = vmul.f32 %v106, %v112
      %v114 = vlaneseq
      %v115 = vshrl.u32 %v114, 7
      %v116 = vsub.s32 1, %v115
      %v117 = vrot.slane %v108, %v116
      %v118 = vmul.f32 %v107, %v117
      %v119 = vadd.f32 %v113, %v118
      %v120 = vsel %vm93, %v119, 0.0
      %121 = vadd.xlane.f32.xlu0 %v120
      %v122 = vpop.xlane.xlu0 %121
      %s123 = sld [smem:[#allocation4]]
      %v124 = vstv %s123
      %v125 = vadd.f32 %v122, %v124
      %v126 = vxor.u32 %v125, 2147483648
      %v127 = vmul.f32 %v126, 1.442695
      %v128 = vpow.pop %v127
      %v129 = vadd.f32 %v128, 1.0
      %v130 = vrcp.pop %v129
      %v131 = vmul.f32 1.0, %v130
      %133 = vrot.lane.b32.xlu0 %v106, 8
      %v134 = vpop.permute.xlu0 %133
      %vm136 = vcmask 64512
      %v137 = vsel %vm136, 0.0, %v134
      %vm138 = vcmask 465920
      %v139 = vsel %vm138, %v137, 0.0
      %141 = vrot.lane.b32.xlu0 %v107, 8
      %v142 = vpop.permute.xlu0 %141
      %v144 = vsel %vm136, 0.0, %v142
      %v145 = vsel %vm138, %v144, 0.0
      %v146 = vlaneseq
      %v147 = vand.u32 %v146, 127
      %vm148 = vcmp.lt.s32.totalorder %v147, 0
      %v149 = vsub.s32 0, %v147
      %v150 = vsel %vm148, %v149, %v147
      %v151 = vmul.u32.u64.compose %v150, 2454267026
      %v152 = vextract.low.u32 %v151
      %v153 = vextract.high.u32 %v151
      %vm154 = vc.u32 %v152, 2454267026
      %v155 = vsel %vm154, 1, 0
      %v156 = vadd.s32 %v153, %v155
      %v157 = vshrl.u32 %v156, 2
      %v158 = vmul.u32 %v157, 7
      %v159 = vsub.s32 %v150, %v158
      %v160 = vsub.s32 0, %v159
      %v161 = vsel %vm148, %v160, %v159
      %vm162 = vcmp.ne.s32.totalorder %v161, 0
      %vm163 = vcmp.lt.s32.totalorder %v161, 0
      %vm164 = vmand %vm163, %vm162
      %v165 = vadd.s32 %v161, 7
      %v166 = vsel %vm164, %v165, %v161
      %vm167 = vcmp.ge.s32.totalorder %v166, 1
      %vm168 = vcmp.le.s32.totalorder %v166, 5
      %s169 = sld [smem:[#allocation9]]
      %v170 = vsel %vm167, 1, 0
      %vm171 = vcmp.eq.s32.totalorder %v170, 1
      %v172 = vsel %vm171, %v139, 0.0
      %v173 = vstv %s169
      %v174 = vmul.f32 %v173, %v172
      %v175 = vadd.f32 %v174, 0.0
      %s176 = sld [smem:[#allocation9 + $0x1]]
      %v177 = vstv %s176
      %v178 = vmul.f32 %v177, %v139
      %180 = vrot.lane.b32.xlu0 %v178, 127
      %v181 = vpop.permute.xlu0 %180
      %v183 = vadd.f32 %v175, %v181
      %s184 = sld [smem:[#allocation9 + $0x2]]
      %v185 = vsel %vm168, 1, 0
      %vm186 = vcmp.eq.s32.totalorder %v185, 1
      %188 = vrot.lane.b32.xlu0 %v139, 126
      %v189 = vpop.permute.xlu0 %188
      %v191 = vsel %vm186, %v189, 0.0
      %v192 = vstv %s184
      %v193 = vmul.f32 %v192, %v191
      %v194 = vadd.f32 %v183, %v193
      %s195 = sld [smem:[#allocation9 + $0x3]]
      %196 = vrot.lane.b32.xlu0 %v139, 121
      %v197 = vpop.permute.xlu0 %196
      %v199 = vsel %vm171, %v197, 0.0
      %v200 = vstv %s195
      %v201 = vmul.f32 %v200, %v199
      %v202 = vadd.f32 %v194, %v201
      %s203 = sld [smem:[#allocation9 + $0x4]]
      %v204 = vstv %s203
      %v205 = vmul.f32 %v204, %v139
      %207 = vrot.lane.b32.xlu0 %v205, 120
      %v208 = vpop.permute.xlu0 %207
      %v210 = vadd.f32 %v202, %v208
      %s211 = sld [smem:[#allocation9 + $0x5]]
      %212 = vrot.lane.b32.xlu0 %v139, 119
      %v213 = vpop.permute.xlu0 %212
      %v215 = vsel %vm186, %v213, 0.0
      %v216 = vstv %s211
      %v217 = vmul.f32 %v216, %v215
      %v218 = vadd.f32 %v210, %v217
      %s219 = sld [smem:[#allocation9 + $0x6]]
      %220 = vrot.lane.b32.xlu0 %v139, 114
      %v221 = vpop.permute.xlu0 %220
      %v223 = vsel %vm171, %v221, 0.0
      %v224 = vstv %s219
      %v225 = vmul.f32 %v224, %v223
      %v226 = vadd.f32 %v218, %v225
      %s227 = sld [smem:[#allocation9 + $0x7]]
      %v228 = vstv %s227
      %v229 = vmul.f32 %v228, %v139
      %231 = vrot.lane.b32.xlu0 %v229, 113
      %v232 = vpop.permute.xlu0 %231
      %v234 = vadd.f32 %v226, %v232
      %s235 = sld [smem:[#allocation9 + $0x8]]
      %236 = vrot.lane.b32.xlu0 %v139, 112
      %v237 = vpop.permute.xlu0 %236
      %v239 = vsel %vm186, %v237, 0.0
      %v240 = vstv %s235
      %v241 = vmul.f32 %v240, %v239
      %v242 = vadd.f32 %v234, %v241
      %s243 = sld [smem:[#allocation9 + $0x9]]
      %v244 = vsel %vm171, %v145, 0.0
      %v245 = vstv %s243
      %v246 = vmul.f32 %v245, %v244
      %v247 = vadd.f32 %v242, %v246
      %s248 = sld [smem:[#allocation9 + $0xa]]
      %v249 = vstv %s248
      %v250 = vmul.f32 %v249, %v145
      %252 = vrot.lane.b32.xlu0 %v250, 127
      %v253 = vpop.permute.xlu0 %252
      %v255 = vadd.f32 %v247, %v253
      %s256 = sld [smem:[#allocation9 + $0xb]]
      %258 = vrot.lane.b32.xlu0 %v145, 126
      %v259 = vpop.permute.xlu0 %258
      %v261 = vsel %vm186, %v259, 0.0
      %v262 = vstv %s256
      %v263 = vmul.f32 %v262, %v261
      %v264 = vadd.f32 %v255, %v263
      %s265 = sld [smem:[#allocation9 + $0xc]]
      %266 = vrot.lane.b32.xlu0 %v145, 121
      %v267 = vpop.permute.xlu0 %266
      %v269 = vsel %vm171, %v267, 0.0
      %v270 = vstv %s265
      %v271 = vmul.f32 %v270, %v269
      %v272 = vadd.f32 %v264, %v271
      %s273 = sld [smem:[#allocation9 + $0xd]]
      %v274 = vstv %s273
      %v275 = vmul.f32 %v274, %v145
      %277 = vrot.lane.b32.xlu0 %v275, 120
      %v278 = vpop.permute.xlu0 %277
      %v280 = vadd.f32 %v272, %v278
      %s281 = sld [smem:[#allocation9 + $0xe]]
      %282 = vrot.lane.b32.xlu0 %v145, 119
      %v283 = vpop.permute.xlu0 %282
      %v285 = vsel %vm186, %v283, 0.0
      %v286 = vstv %s281
      %v287 = vmul.f32 %v286, %v285
      %v288 = vadd.f32 %v280, %v287
      %s289 = sld [smem:[#allocation9 + $0xf]]
      %290 = vrot.lane.b32.xlu0 %v145, 114
      %v291 = vpop.permute.xlu0 %290
      %v293 = vsel %vm171, %v291, 0.0
      %v294 = vstv %s289
      %v295 = vmul.f32 %v294, %v293
      %v296 = vadd.f32 %v288, %v295
      %s297 = sld [smem:[#allocation9 + $0x10]]
      %v298 = vstv %s297
      %v299 = vmul.f32 %v298, %v145
      %301 = vrot.lane.b32.xlu0 %v299, 113
      %v302 = vpop.permute.xlu0 %301
      %v304 = vadd.f32 %v296, %v302
      %s305 = sld [smem:[#allocation9 + $0x11]]
      %306 = vrot.lane.b32.xlu0 %v145, 112
      %v307 = vpop.permute.xlu0 %306
      %v309 = vsel %vm186, %v307, 0.0
      %v310 = vstv %s305
      %v311 = vmul.f32 %v310, %v309
      %v312 = vadd.f32 %v304, %v311
      %v313 = vxor.u32 %v312, 2147483648
      %v314 = vmul.f32 %v313, 1.442695
      %v315 = vpow.pop %v314
      %v316 = vadd.f32 %v315, 1.0
      %v317 = vrcp.pop %v316
      %v318 = vmul.f32 1.0, %v317
      %v319 = vmul.f32 %v318, %v131
      %320 = vst.msk [vmem:[#allocation10] sm:$0x3] %vm93, %v319
    $region33: #{tpu_custom_call.1} parent=1 // pred_fallthru
      _
    // Predicated region
    $region34: #{tpu_custom_call.1} parent=1 // pred_check
      _
    $region35: #{tpu_custom_call.1} parent=1 // pred_check_branch
      %322 = sbr.rel (0) target = $region37
    $region36: #{tpu_custom_call.1} parent=1 // pred_region
      %s324 = ssub.s32 32, 32
      %325 = vsyncadd [#allocation7], %s324
      %s327 = sshll.u32 [#allocation10], 4
      %s328 = int_to_ptr.vmem [resolvable:$true] %s327
      %330 = dma.vmem_to_hbm [thread:$0]  %s328, 32, %s4, [#allocation7]
    $region37: #{tpu_custom_call.1} parent=1 // pred_fallthru
      _
    // Predicated region
    $region38: #{tpu_custom_call.1} parent=1 // pred_check
      _
    $region39: #{tpu_custom_call.1} parent=1 // pred_check_branch
      %332 = sbr.rel (0) target = $region41
    $region40: #{tpu_custom_call.1} parent=1 // pred_region
      %333 = dma.done [#allocation7], 32
    $region41: #{tpu_custom_call.1} parent=1 // pred_fallthru
      _
    %334 = vsyncpa [#allocation6], 1
    %335 = vsyncpa [#allocation7], 1
    %336 = vsyncpa [#allocation8], 1

</llo_original>
